<compile_context>
chip_gen: v5e
topology: v5e:2x2
jax: 0.10.0
libtpu: 0.0.40
codegen_flags: <defaults>
</compile_context>

<pallas_src>
import jax
import jax.numpy as jnp
from jax.experimental import pallas as pl
from jax.experimental.pallas import tpu as pltpu

WINDOW_SIZE = 5
H1 = 16
H2 = 8
OUT = 1

# Lane-dense batch tile.  512 columns of f32 intermediates (5+16+8+1 rows,
# sublane-padded) is a few tens of KiB -> comfortably double-buffered on
# v5e (16 MiB scoped default), v6e (128 MiB) and v7x (64 MiB physical).
MAX_TILE_B = 512


def _mlp_kernel(x_ref, w1_ref, b1_ref, w2_ref, b2_ref, w3_ref, b3_ref, o_ref):
    # x_ref: (5, TILE_B)  -- batch on the lane axis.
    # Three MXU matmuls with the batch on the N (lane) axis, fused with
    # ReLU / ReLU / Sigmoid.  Biases (N,1) broadcast across lanes.
    x = x_ref[...]

    h1 = jnp.dot(w1_ref[...], x, preferred_element_type=jnp.float32)   # (16, TB)
    h1 = jnp.maximum(h1 + b1_ref[...], 0.0)                            # ReLU

    h2 = jnp.dot(w2_ref[...], h1, preferred_element_type=jnp.float32)  # (8, TB)
    h2 = jnp.maximum(h2 + b2_ref[...], 0.0)                            # ReLU

    h3 = jnp.dot(w3_ref[...], h2, preferred_element_type=jnp.float32)  # (1, TB)
    o_ref[...] = jax.nn.sigmoid(h3 + b3_ref[...])                      # Sigmoid


def _round_up(n, m):
    return ((n + m - 1) // m) * m


def mlp_forward(x, params):
    """x: (B, WINDOW_SIZE) float32 -> (B, 1) float32."""
    w1, b1, w2, b2, w3, b3 = params
    B = x.shape[0]

    # Lane-aligned batch tile; small batches get a single 128-wide tile.
    tile_b = min(MAX_TILE_B, _round_up(B, 128))
    b_pad = _round_up(B, tile_b)
    num_tiles = b_pad // tile_b

    # Wrapper-side layout plumbing: feature-major, pad batch to the tile grid.
    x_t = jnp.pad(x.T, ((0, 0), (0, b_pad - B)))          # (5, B_pad)

    const2d = lambda shape: pl.BlockSpec(shape, lambda i: (0, 0))

    flops_per_row = 2 * (WINDOW_SIZE * H1 + H1 * H2 + H2 * OUT)
    cost = pl.CostEstimate(
        flops=flops_per_row * b_pad,
        transcendentals=b_pad,  # sigmoid exp
        bytes_accessed=4 * (b_pad * (WINDOW_SIZE + OUT)
                            + WINDOW_SIZE * H1 + H1 * H2 + H2 * OUT
                            + H1 + H2 + OUT),
    )

    out = pl.pallas_call(
        _mlp_kernel,
        out_shape=jax.ShapeDtypeStruct((OUT, b_pad), jnp.float32),
        grid=(num_tiles,),
        in_specs=[
            # x: tiled over batch (lane axis).
            pl.BlockSpec((WINDOW_SIZE, tile_b), lambda i: (0, i)),
            # Weights / biases: constant block index -> VMEM-resident.
            const2d(w1.shape), const2d(b1.shape),
            const2d(w2.shape), const2d(b2.shape),
            const2d(w3.shape), const2d(b3.shape),
        ],
        out_specs=pl.BlockSpec((OUT, tile_b), lambda i: (0, i)),
        compiler_params=pltpu.CompilerParams(
            dimension_semantics=("parallel",),        # megacore sharding on v7x
            vmem_limit_bytes=32 * 1024 * 1024,        # explicit, safe on v5e/v6e/v7x
        ),
        cost_estimate=cost,
    )(x_t, w1, b1, w2, b2, w3, b3)

    # Back to the PyTorch-facing layout: (B, 1), dropping padded columns.
    return out[:, :B].T


def init_params(key):
    """PyTorch nn.Linear-style init (uniform +-1/sqrt(fan_in)).

    Weights stored PyTorch-native as (out_features, in_features);
    biases as (out_features, 1) so they broadcast over the lane (batch) axis.
    """
    ks = jax.random.split(key, 6)

    def linear(kw, kb, fan_in, fan_out):
        bound = 1.0 / jnp.sqrt(float(fan_in))
        w = jax.random.uniform(kw, (fan_out, fan_in), jnp.float32, -bound, bound)
        b = jax.random.uniform(kb, (fan_out, 1), jnp.float32, -bound, bound)
        return w, b

    w1, b1 = linear(ks[0], ks[1], WINDOW_SIZE, H1)
    w2, b2 = linear(ks[2], ks[3], H1, H2)
    w3, b3 = linear(ks[4], ks[5], H2, OUT)
    return (w1, b1, w2, b2, w3, b3)


def _reference(x, params):
    w1, b1, w2, b2, w3, b3 = params
    h = jnp.maximum(x @ w1.T + b1.T, 0.0)
    h = jnp.maximum(h @ w2.T + b2.T, 0.0)
    return jax.nn.sigmoid(h @ w3.T + b3.T)


if __name__ == "__main__":
    key = jax.random.PRNGKey(0)
    k_param, k_x = jax.random.split(key)

    params = init_params(k_param)
    batch = 8
    x = jax.random.normal(k_x, (batch, WINDOW_SIZE), dtype=jnp.float32)

    out = mlp_forward(x, params)
    out = jax.block_until_ready(out)

    ref = _reference(x, params)
    assert out.shape == (batch, 1)
    assert jnp.allclose(out, ref, atol=1e-5, rtol=1e-5)

    # Also exercise a batch that is not a multiple of the tile (ragged tail).
    x2 = jax.random.normal(jax.random.PRNGKey(7), (300, WINDOW_SIZE), jnp.float32)
    out2 = jax.block_until_ready(mlp_forward(x2, params))
    assert out2.shape == (300, 1)
    assert jnp.allclose(out2, _reference(x2, params), atol=1e-5, rtol=1e-5)

    print("KERNEL_OK")
</pallas_src>

<mosaic_0001>
module attributes {stable_mosaic.version = 11 : i64} {
  func.func @_mlp_kernel(%arg0: i32, %arg1: memref<5x128xf32, #tpu.memory_space<vmem>>, %arg2: memref<16x5xf32, #tpu.memory_space<vmem>>, %arg3: memref<16x1xf32, #tpu.memory_space<vmem>>, %arg4: memref<8x16xf32, #tpu.memory_space<vmem>>, %arg5: memref<8x1xf32, #tpu.memory_space<vmem>>, %arg6: memref<1x8xf32, #tpu.memory_space<vmem>>, %arg7: memref<1x1xf32, #tpu.memory_space<vmem>>, %arg8: memref<1x128xf32, #tpu.memory_space<vmem>>) attributes {dimension_semantics = [#tpu.dimension_semantics<parallel>], iteration_bounds = array<i64: 1>, scalar_prefetch = 0 : i64, scratch_operands = 0 : i64, tpu.core_type = #tpu.core_type<tc>, window_params = [{transform_indices = @transform_0, window_bounds = array<i64: 5, 128>}, {pipeline_mode = #tpu.pipeline_mode<synchronous>, transform_indices = @transform_1, window_bounds = array<i64: 16, 5>}, {pipeline_mode = #tpu.pipeline_mode<synchronous>, transform_indices = @transform_2, window_bounds = array<i64: 16, 1>}, {pipeline_mode = #tpu.pipeline_mode<synchronous>, transform_indices = @transform_3, window_bounds = array<i64: 8, 16>}, {pipeline_mode = #tpu.pipeline_mode<synchronous>, transform_indices = @transform_4, window_bounds = array<i64: 8, 1>}, {pipeline_mode = #tpu.pipeline_mode<synchronous>, transform_indices = @transform_5, window_bounds = array<i64: 1, 8>}, {pipeline_mode = #tpu.pipeline_mode<synchronous>, transform_indices = @transform_6, window_bounds = array<i64: 1, 1>}, {transform_indices = @transform_7, window_bounds = array<i64: 1, 128>}]} {
    %c0 = arith.constant 0 : index
    %c0_0 = arith.constant 0 : index
    %0 = vector.load %arg1[%c0, %c0_0] : memref<5x128xf32, #tpu.memory_space<vmem>>, vector<5x128xf32>
    %c0_1 = arith.constant 0 : index
    %c0_2 = arith.constant 0 : index
    %1 = vector.load %arg2[%c0_1, %c0_2] : memref<16x5xf32, #tpu.memory_space<vmem>>, vector<16x5xf32>
    %cst = arith.constant dense<0.000000e+00> : vector<16x128xf32>
    %2 = tpu.matmul %1, %0, %cst {dimension_numbers = #tpu.dot_dimension_numbers<[1], [0], [0], [1], [0, 0, 1, 1], [], []>} : vector<16x5xf32>, vector<5x128xf32>, vector<16x128xf32> -> vector<16x128xf32>
    %c0_3 = arith.constant 0 : index
    %c0_4 = arith.constant 0 : index
    %3 = vector.load %arg3[%c0_3, %c0_4] : memref<16x1xf32, #tpu.memory_space<vmem>>, vector<16x1xf32>
    %4 = vector.broadcast %3 : vector<16x1xf32> to vector<16x128xf32>
    %5 = arith.addf %2, %4 : vector<16x128xf32>
    %cst_5 = arith.constant 0.000000e+00 : f32
    %6 = vector.broadcast %cst_5 : f32 to vector<16x128xf32>
    %7 = arith.maximumf %5, %6 : vector<16x128xf32>
    %c0_6 = arith.constant 0 : index
    %c0_7 = arith.constant 0 : index
    %8 = vector.load %arg4[%c0_6, %c0_7] : memref<8x16xf32, #tpu.memory_space<vmem>>, vector<8x16xf32>
    %cst_8 = arith.constant dense<0.000000e+00> : vector<8x128xf32>
    %9 = tpu.matmul %8, %7, %cst_8 {dimension_numbers = #tpu.dot_dimension_numbers<[1], [0], [0], [1], [0, 0, 1, 1], [], []>} : vector<8x16xf32>, vector<16x128xf32>, vector<8x128xf32> -> vector<8x128xf32>
    %c0_9 = arith.constant 0 : index
    %c0_10 = arith.constant 0 : index
    %10 = vector.load %arg5[%c0_9, %c0_10] : memref<8x1xf32, #tpu.memory_space<vmem>>, vector<8x1xf32>
    %11 = vector.broadcast %10 : vector<8x1xf32> to vector<8x128xf32>
    %12 = arith.addf %9, %11 : vector<8x128xf32>
    %cst_11 = arith.constant 0.000000e+00 : f32
    %13 = vector.broadcast %cst_11 : f32 to vector<8x128xf32>
    %14 = arith.maximumf %12, %13 : vector<8x128xf32>
    %c0_12 = arith.constant 0 : index
    %c0_13 = arith.constant 0 : index
    %15 = vector.load %arg6[%c0_12, %c0_13] : memref<1x8xf32, #tpu.memory_space<vmem>>, vector<1x8xf32>
    %cst_14 = arith.constant dense<0.000000e+00> : vector<1x128xf32>
    %16 = tpu.matmul %15, %14, %cst_14 {dimension_numbers = #tpu.dot_dimension_numbers<[1], [0], [0], [1], [0, 0, 1, 1], [], []>} : vector<1x8xf32>, vector<8x128xf32>, vector<1x128xf32> -> vector<1x128xf32>
    %c0_15 = arith.constant 0 : index
    %c0_16 = arith.constant 0 : index
    %17 = vector.load %arg7[%c0_15, %c0_16] : memref<1x1xf32, #tpu.memory_space<vmem>>, vector<1x1xf32>
    %18 = vector.broadcast %17 : vector<1x1xf32> to vector<1x128xf32>
    %19 = arith.addf %16, %18 : vector<1x128xf32>
    %20 = arith.negf %19 : vector<1x128xf32>
    %21 = math.exp %20 : vector<1x128xf32>
    %cst_17 = arith.constant 1.000000e+00 : f32
    %22 = vector.broadcast %cst_17 : f32 to vector<1x128xf32>
    %23 = arith.addf %22, %21 : vector<1x128xf32>
    %24 = arith.divf %22, %23 : vector<1x128xf32>
    %c0_18 = arith.constant 0 : index
    %c0_19 = arith.constant 0 : index
    %25 = vector.load %arg8[%c0_18, %c0_19] : memref<1x128xf32, #tpu.memory_space<vmem>>, vector<1x128xf32>
    tpu.vector_store %arg8[%c0_18, %c0_19], %24 {strides = array<i32>} : memref<1x128xf32, #tpu.memory_space<vmem>>, vector<1x128xf32>,
    return
  }
  func.func @transform_0(%arg0: i32) -> (i32, i32) {
    %c0_i32 = arith.constant 0 : i32
    %c0_i32_0 = arith.constant 0 : i32
    return %c0_i32, %arg0 : i32, i32
  }
  func.func @transform_1(%arg0: i32) -> (i32, i32) {
    %c0_i32 = arith.constant 0 : i32
    %c0_i32_0 = arith.constant 0 : i32
    %c0_i32_1 = arith.constant 0 : i32
    return %c0_i32, %c0_i32_0 : i32, i32
  }
  func.func @transform_2(%arg0: i32) -> (i32, i32) {
    %c0_i32 = arith.constant 0 : i32
    %c0_i32_0 = arith.constant 0 : i32
    %c0_i32_1 = arith.constant 0 : i32
    return %c0_i32, %c0_i32_0 : i32, i32
  }
  func.func @transform_3(%arg0: i32) -> (i32, i32) {
    %c0_i32 = arith.constant 0 : i32
    %c0_i32_0 = arith.constant 0 : i32
    %c0_i32_1 = arith.constant 0 : i32
    return %c0_i32, %c0_i32_0 : i32, i32
  }
  func.func @transform_4(%arg0: i32) -> (i32, i32) {
    %c0_i32 = arith.constant 0 : i32
    %c0_i32_0 = arith.constant 0 : i32
    %c0_i32_1 = arith.constant 0 : i32
    return %c0_i32, %c0_i32_0 : i32, i32
  }
  func.func @transform_5(%arg0: i32) -> (i32, i32) {
    %c0_i32 = arith.constant 0 : i32
    %c0_i32_0 = arith.constant 0 : i32
    %c0_i32_1 = arith.constant 0 : i32
    return %c0_i32, %c0_i32_0 : i32, i32
  }
  func.func @transform_6(%arg0: i32) -> (i32, i32) {
    %c0_i32 = arith.constant 0 : i32
    %c0_i32_0 = arith.constant 0 : i32
    %c0_i32_1 = arith.constant 0 : i32
    return %c0_i32, %c0_i32_0 : i32, i32
  }
  func.func @transform_7(%arg0: i32) -> (i32, i32) {
    %c0_i32 = arith.constant 0 : i32
    %c0_i32_0 = arith.constant 0 : i32
    return %c0_i32, %arg0 : i32, i32
  }
}

</mosaic_0001>

<llo_original>
// kernel: tpu_custom_call.1
$region0: #{tpu_custom_call.1}
  #allocation0 [shape = 'u32[]', space=smem, size = 0x4, offset = 0x4, fixed_abs, tag = 'smem constant byte address 0x4 - core index']
  #allocation1 [shape = 'u32[72,128]{1,0:T(1,128)}', space=vmem, size = 0x9000, scoped, tag = 'internal scratch']
  #allocation2 [shape = 'f32[1,1]{1,0:T(1,128)S(1)}', space=vmem, size = 0x200, scoped, tag = 'scoped memory for tpu_custom_call.1']
  %s0 = inlined_call_operand.vmem [shape: f32[5,128], index: 0, kind: input, shape index: {}]
  %s1 = inlined_call_operand.vmem [shape: f32[16,5], index: 1, kind: input, shape index: {}]
  %s2 = inlined_call_operand.vmem [shape: f32[16,1], index: 2, kind: input, shape index: {}]
  %s3 = inlined_call_operand.vmem [shape: f32[8,16], index: 3, kind: input, shape index: {}]
  %s4 = inlined_call_operand.vmem [shape: f32[8,1], index: 4, kind: input, shape index: {}]
  %s5 = inlined_call_operand.vmem [shape: f32[1,8], index: 5, kind: input, shape index: {}]
  %s6 = inlined_call_operand.<no memory space> [shape: f32[1,1], index: 6, kind: input, shape index: {}]
  %s7 = inlined_call_operand.hbm [shape: f32[1,128], index: 7, kind: output, shape index: {}]
  %s8 = sld [smem:[#allocation0]]
  $region38: #{tpu_custom_call.1} parent=0
    _
  %s10 = ssub.s32 1, %s8
  %s11 = scalar_select 0, %s10, %s8
  %v12 = vstv %s6
  %13 = vst [vmem:[#allocation2] sm:$0x1] %v12
  $region1: #{tpu_custom_call.1} parent=0
    #allocation3 [shape = 'u8[512]{0}', space=vmem, size = 0x400, scoped, tag = 'output window, operand 0, single buffered']
    #allocation4 [shape = 's32[1]{0}', space=sflag, size = 0x4, scoped, tag = 'scoped memory for tpu_custom_call.1']
    %14 = vsyncpa [#allocation4], 0
    // Predicated region
    $region2: #{tpu_custom_call.1} parent=1 // pred_check
      _
    $region3: #{tpu_custom_call.1} parent=1 // pred_check_branch
      %16 = sbr.rel (0) target = $region5
    $region4: #{tpu_custom_call.1} parent=1 // pred_region
      _
    $region5: #{tpu_custom_call.1} parent=1 // pred_fallthru
      _
    // Predicated region
    $region6: #{tpu_custom_call.1} parent=1 // pred_check
      _
    $region7: #{tpu_custom_call.1} parent=1 // pred_check_branch
      %18 = sbr.rel (0) target = $region9
    $region8: #{tpu_custom_call.1} parent=1 // pred_region
      _
    $region9: #{tpu_custom_call.1} parent=1 // pred_fallthru
      _
    // Predicated region
    $region10: #{tpu_custom_call.1} parent=1 // pred_check
      _
    $region11: #{tpu_custom_call.1} parent=1 // pred_check_branch
      %20 = sbr.rel (0) target = $region13
    $region12: #{tpu_custom_call.1} parent=1 // pred_region
      _
    $region13: #{tpu_custom_call.1} parent=1 // pred_fallthru
      _
    // Predicated region
    $region14: #{tpu_custom_call.1} parent=1 // pred_check
      _
    $region15: #{tpu_custom_call.1} parent=1 // pred_check_branch
      %22 = sbr.rel (0) target = $region17
    $region16: #{tpu_custom_call.1} parent=1 // pred_region
      _
    $region17: #{tpu_custom_call.1} parent=1 // pred_fallthru
      _
    // Predicated region
    $region18: #{tpu_custom_call.1} parent=1 // pred_check
      _
    $region19: #{tpu_custom_call.1} parent=1 // pred_check_branch
      %24 = sbr.rel (0) target = $region21
    $region20: #{tpu_custom_call.1} parent=1 // pred_region
      _
    $region21: #{tpu_custom_call.1} parent=1 // pred_fallthru
      _
    // Predicated region
    $region22: #{tpu_custom_call.1} parent=1 // pred_check
      _
    $region23: #{tpu_custom_call.1} parent=1 // pred_check_branch
      %26 = sbr.rel (0) target = $region25
    $region24: #{tpu_custom_call.1} parent=1 // pred_region
      _
    $region25: #{tpu_custom_call.1} parent=1 // pred_fallthru
      _
    // Predicated region
    $region26: #{tpu_custom_call.1} parent=1 // pred_check
      _
    $region27: #{tpu_custom_call.1} parent=1 // pred_check_branch
      %28 = sbr.rel (0) target = $region29
    $region28: #{tpu_custom_call.1} parent=1 // pred_region
      _
    $region29: #{tpu_custom_call.1} parent=1 // pred_fallthru
      _
    %v29 = vld [vmem:[%s0] sm:$0x1f]
    %v30 = vld [vmem:[%s1] sm:$0xff]
    %v31 = vld [vmem:[%s1 + $0x8] sm:$0xff]
    %v32 = vld [vmem:[%s2] sm:$0xff]
    %v33 = vld [vmem:[%s2 + $0x8] sm:$0xff]
    %35 = vset.pattern.permute.xlu0 0
    %36 = vperm.xlu0 %35, %v32
    %v37 = vpop.permute.xlu0 %36
    %40 = vset.pattern.permute.xlu0 0
    %41 = vperm.xlu0 %40, %v33
    %v42 = vpop.permute.xlu0 %41
    %vm44 = vcmask 39936
    %v46 = vsel %vm44, %v30, 0
    %v49 = vsel %vm44, %v31, 0
    %vm51 = vcmask 1044480
    %v53 = vsel %vm51, %v29, 0
    %55 = vmatpush.msra.mxu0 0.0
    %56 = vmatpush.msra.mxu0 0.0
    %57 = vmatpush.msra.mxu0 0.0
    %58 = vmatpush.msra.mxu0 0.0
    %59 = vmatpush.msra.mxu0 0.0
    %60 = vmatpush.msra.mxu0 0.0
    %61 = vmatpush.msra.mxu0 0.0
    %62 = vmatpush.msra.mxu0 0.0
    %63 = vmatpush.msra.mxu0 0.0
    %64 = vmatpush.msra.mxu0 0.0
    %65 = vmatpush.msra.mxu0 0.0
    %66 = vmatpush.msra.mxu0 0.0
    %67 = vmatpush.msra.mxu0 0.0
    %68 = vmatpush.msra.mxu0 0.0
    %69 = vmatpush.msra.mxu0 0.0
    %70 = vmatpush.msra.mxu0 %v53
    %71 = vmatmul.f32.gmra.mxu0 %v46
    %v72 = vpop.f32.mrf.mxu0
    %v73 = vadd.f32 %v37, %v72
    %74 = vmatmul.f32.gmra.mxu0 %v49
    %v75 = vpop.f32.mrf.mxu0
    %v76 = vadd.f32 %v42, %v75
    %77 = vdwg.mxu0
    %v78 = vmax.f32 %v73, 0.0
    %v79 = vmax.f32 %v76, 0.0
    %v80 = vld [vmem:[%s3] sm:$0xff]
    %v81 = vld [vmem:[%s4] sm:$0xff]
    %83 = vset.pattern.permute.xlu0 0
    %84 = vperm.xlu0 %83, %v81
    %v85 = vpop.permute.xlu0 %84
    %vm87 = vcmask 130048
    %v89 = vsel %vm87, %v80, 0
    %91 = vmatpush.msra.mxu0 0.0
    %92 = vmatpush.msra.mxu0 0.0
    %93 = vmatpush.msra.mxu0 0.0
    %94 = vmatpush.msra.mxu0 0.0
    %95 = vmatpush.msra.mxu0 0.0
    %96 = vmatpush.msra.mxu0 0.0
    %97 = vmatpush.msra.mxu0 0.0
    %98 = vmatpush.msra.mxu0 0.0
    %99 = vmatpush.msra.mxu0 0.0
    %100 = vmatpush.msra.mxu0 0.0
    %101 = vmatpush.msra.mxu0 0.0
    %102 = vmatpush.msra.mxu0 0.0
    %103 = vmatpush.msra.mxu0 0.0
    %104 = vmatpush.msra.mxu0 0.0
    %105 = vmatpush.msra.mxu0 %v79
    %106 = vmatpush.msra.mxu0 %v78
    %107 = vmatmul.f32.gmra.mxu0 %v89
    %v108 = vpop.f32.mrf.mxu0
    %v109 = vadd.f32 %v85, %v108
    %110 = vdwg.mxu0
    %v111 = vmax.f32 %v109, 0.0
    %v112 = vld [vmem:[%s5] sm:$0x1]
    %v113 = vld [vmem:[#allocation2] sm:$0x1]
    %115 = vset.pattern.permute.xlu0 0
    %116 = vperm.xlu0 %115, %v113
    %v117 = vpop.permute.xlu0 %116
    %v119 = vperm.slane %v117, 0
    %vm120 = vcmask 64512
    %v122 = vsel %vm120, %v112, 0
    %124 = vmatpush.msra.mxu0 0.0
    %125 = vmatpush.msra.mxu0 0.0
    %126 = vmatpush.msra.mxu0 0.0
    %127 = vmatpush.msra.mxu0 0.0
    %128 = vmatpush.msra.mxu0 0.0
    %129 = vmatpush.msra.mxu0 0.0
    %130 = vmatpush.msra.mxu0 0.0
    %131 = vmatpush.msra.mxu0 0.0
    %132 = vmatpush.msra.mxu0 0.0
    %133 = vmatpush.msra.mxu0 0.0
    %134 = vmatpush.msra.mxu0 0.0
    %135 = vmatpush.msra.mxu0 0.0
    %136 = vmatpush.msra.mxu0 0.0
    %137 = vmatpush.msra.mxu0 0.0
    %138 = vmatpush.msra.mxu0 0.0
    %139 = vmatpush.msra.mxu0 %v111
    %140 = vmatmul.f32.gmra.mxu0 %v122
    %v141 = vpop.f32.mrf.mxu0
    %v142 = vadd.f32 %v119, %v141
    %143 = vdwg.mxu0
    %v144 = vxor.u32 %v142, 2147483648
    %v145 = vmul.f32 %v144, 1.442695
    %v146 = vpow.pop %v145
    %v147 = vadd.f32 %v146, 1.0
    %v148 = vrcp.pop %v147
    %v149 = vmul.f32 %v147, %v148
    %v150 = vsub.f32 1.0, %v149
    %v151 = vmul.f32 %v148, %v150
    %v152 = vadd.f32 %v148, %v151
    %vm153 = vweird.f32 %v147
    %vm154 = vweird.f32 %v148
    %vm155 = vmor %vm153, %vm154
    %v156 = vsel %vm155, %v148, %v152
    %v157 = vand.u32 2147483647, %v147
    %vm158 = vcmp.eq.f32.partialorder %v157, 8.507059e+37
    %v159 = vand.u32 %v147, 2147483648
    %v160 = vor.u32 1.1754944e-38, %v159
    %v161 = vsel %vm158, %v160, %v156
    %v162 = vmul.f32 1.0, %v161
    %163 = vst [vmem:[#allocation3] sm:$0x1] %v162
    // Predicated region
    $region30: #{tpu_custom_call.1} parent=1 // pred_check
      _
    $region31: #{tpu_custom_call.1} parent=1 // pred_check_branch
      %165 = sbr.rel (0) target = $region33
    $region32: #{tpu_custom_call.1} parent=1 // pred_region
      %167 = vsyncadd [#allocation4], 0
      %s169 = sshll.u32 [#allocation3], 4
      %s170 = int_to_ptr.vmem [resolvable:$true] %s169
      %s171 = sshll.u32 %s7, 4
      %s172 = int_to_ptr.hbm [resolvable:$true] %s171
      %174 = dma.vmem_to_hbm [thread:$0]  %s170, 16, %s172, [#allocation4]
    $region33: #{tpu_custom_call.1} parent=1 // pred_fallthru
      _
    // Predicated region
    $region34: #{tpu_custom_call.1} parent=1 // pred_check
      _
    $region35: #{tpu_custom_call.1} parent=1 // pred_check_branch
      %176 = sbr.rel (0) target = $region37
    $region36: #{tpu_custom_call.1} parent=1 // pred_region
      %178 = dma.done [#allocation4], 16
    $region37: #{tpu_custom_call.1} parent=1 // pred_fallthru
      _
    %179 = vsyncpa [#allocation4], 1

</llo_original>
